<compile_context>
chip_gen: v7x
topology: tpu7x:2x2x1
jax: 0.10.0
libtpu: 0.0.40
codegen_flags: <defaults>
</compile_context>

<pallas_src>
import functools

import jax
import jax.numpy as jnp
from jax.experimental import pallas as pl
from jax.experimental.pallas import tpu as pltpu


def _round_up(x, m):
    return ((x + m - 1) // m) * m


def _patch_embed_kernel(x_ref, w_ref, b_ref, o_ref):
    # x_ref: (TM, K) patch rows; w_ref: (K, Dp) resident; b_ref: (1, Dp) resident f32.
    acc = jnp.dot(x_ref[...], w_ref[...], preferred_element_type=jnp.float32)
    # NOTE: if a K grid axis is ever added, guard this add with pl.when(k == last)
    # so the bias is only applied once per output tile.
    o_ref[...] = (acc + b_ref[...]).astype(o_ref.dtype)


@functools.partial(jax.jit, static_argnames=("patch_size", "block_m", "mxu_dtype"))
def img_patches_forward(img, weight, bias, patch_size, *, block_m=512, mxu_dtype=None):
    """Forward pass of ImgPatches.

    img:    (B, C, H, W)        NCHW, like PyTorch
    weight: (dim, C, P, P)      PyTorch Conv2d weight layout
    bias:   (dim,)
    returns (B, N, dim) with N = (H // P) * (W // P)   [== .flatten(2).transpose(1, 2)]
    """
    B, C, H, W = img.shape
    dim = weight.shape[0]
    P = patch_size
    Hp, Wp = H // P, W // P
    N = Hp * Wp
    K = C * P * P
    M = B * N

    # --- glue: extract non-overlapping patches, flattened in (c, ph, pw) order ---
    x = img.reshape(B, C, Hp, P, Wp, P)
    x = x.transpose(0, 2, 4, 1, 3, 5)                 # (B, Hp, Wp, C, P, P)
    patches = x.reshape(M, K)                         # (M, K)

    # conv weight (dim, C, P, P) -> (K, dim) so the (c, ph, pw) ordering matches.
    w_flat = weight.reshape(dim, K).T                 # (K, dim)

    # Optional reduced-precision MXU path (v6e/v7x); accumulation/epilogue stay f32.
    if mxu_dtype is not None:
        patches = patches.astype(mxu_dtype)
        w_flat = w_flat.astype(mxu_dtype)

    # Lane-dense output: pad dim up to a multiple of 128.
    Dp = _round_up(dim, 128)
    if Dp != dim:
        w_flat = jnp.pad(w_flat, ((0, 0), (0, Dp - dim)))
        bias_p = jnp.pad(bias.astype(jnp.float32), (0, Dp - dim))
    else:
        bias_p = bias.astype(jnp.float32)
    b2d = bias_p.reshape(1, Dp)

    # Tile M: multiple of 8 (sublane), capped at block_m so tiles pipeline nicely
    # and stay well inside VMEM even on v7x (64 MiB).
    TM = min(block_m, _round_up(M, 8))
    TM = _round_up(TM, 8)
    M_pad = _round_up(M, TM)
    if M_pad != M:
        patches = jnp.pad(patches, ((0, M_pad - M), (0, 0)))
    num_m = M_pad // TM

    out = pl.pallas_call(
        _patch_embed_kernel,
        out_shape=jax.ShapeDtypeStruct((M_pad, Dp), img.dtype),
        grid=(num_m,),
        in_specs=[
            pl.BlockSpec((TM, K), lambda i: (i, 0)),    # patch rows, pipelined over M
            pl.BlockSpec((K, Dp), lambda i: (0, 0)),    # weight, VMEM-resident
            pl.BlockSpec((1, Dp), lambda i: (0, 0)),    # bias, VMEM-resident
        ],
        out_specs=pl.BlockSpec((TM, Dp), lambda i: (i, 0)),
        compiler_params=pltpu.CompilerParams(
            dimension_semantics=("parallel",),
            # Allow XLA to fuse the patch reshape/transpose (+ padding) into the
            # input DMA of the patches operand rather than materializing it in HBM.
            allow_input_fusion=[True, False, False],
        ),
    )(patches, w_flat, b2d)

    return out[:M, :dim].reshape(B, N, dim)


if __name__ == "__main__":
    # Small shapes consistent with the module: batch=2, channels=4, spatial=16,
    # patch_size=4 -> N = 16 patches, embedding dim = 32.
    B, C, H, W = 2, 4, 16, 16
    P = 4
    dim = 32

    key = jax.random.PRNGKey(0)
    k_img, k_w, k_b = jax.random.split(key, 3)

    img = jax.random.normal(k_img, (B, C, H, W), dtype=jnp.float32)
    # Deterministic synthetic parameters (Conv2d-shaped): (dim, C, P, P) and (dim,)
    weight = jax.random.normal(k_w, (dim, C, P, P), dtype=jnp.float32) * 0.02
    bias = jax.random.normal(k_b, (dim,), dtype=jnp.float32) * 0.02

    out = img_patches_forward(img, weight, bias, P)   # f32 MXU path for exact check
    out = jax.block_until_ready(out)

    # Reference: lax conv (same semantics as nn.Conv2d stride=kernel), then
    # flatten(2).transpose(1, 2).
    ref = jax.lax.conv_general_dilated(
        img, weight, window_strides=(P, P), padding="VALID",
        dimension_numbers=("NCHW", "OIHW", "NCHW"),
    ) + bias.reshape(1, dim, 1, 1)
    ref = ref.reshape(B, dim, -1).transpose(0, 2, 1)

    assert out.shape == (B, (H // P) * (W // P), dim)
    assert jnp.allclose(out, ref, atol=1e-4, rtol=1e-4)

    print("KERNEL_OK")
</pallas_src>

<mosaic_0001>
module attributes {stable_mosaic.version = 11 : i64} {
  func.func @_patch_embed_kernel(%arg0: i32, %arg1: memref<32x64xf32, #tpu.memory_space<vmem>>, %arg2: memref<64x128xf32, #tpu.memory_space<vmem>>, %arg3: memref<1x128xf32, #tpu.memory_space<vmem>>, %arg4: memref<32x128xf32, #tpu.memory_space<vmem>>) attributes {dimension_semantics = [#tpu.dimension_semantics<parallel>], iteration_bounds = array<i64: 1>, scalar_prefetch = 0 : i64, scratch_operands = 0 : i64, tpu.core_type = #tpu.core_type<tc>, window_params = [{transform_indices = @transform_0, window_bounds = array<i64: 32, 64>}, {pipeline_mode = #tpu.pipeline_mode<synchronous>, transform_indices = @transform_1, window_bounds = array<i64: 64, 128>}, {pipeline_mode = #tpu.pipeline_mode<synchronous>, transform_indices = @transform_2, window_bounds = array<i64: 1, 128>}, {transform_indices = @transform_3, window_bounds = array<i64: 32, 128>}]} {
    %c0 = arith.constant 0 : index
    %c0_0 = arith.constant 0 : index
    %0 = vector.load %arg1[%c0, %c0_0] : memref<32x64xf32, #tpu.memory_space<vmem>>, vector<32x64xf32>
    %c0_1 = arith.constant 0 : index
    %c0_2 = arith.constant 0 : index
    %1 = vector.load %arg2[%c0_1, %c0_2] : memref<64x128xf32, #tpu.memory_space<vmem>>, vector<64x128xf32>
    %cst = arith.constant dense<0.000000e+00> : vector<32x128xf32>
    %2 = tpu.matmul %0, %1, %cst {dimension_numbers = #tpu.dot_dimension_numbers<[1], [0], [0], [1], [0, 0, 1, 1], [], []>} : vector<32x64xf32>, vector<64x128xf32>, vector<32x128xf32> -> vector<32x128xf32>
    %c0_3 = arith.constant 0 : index
    %c0_4 = arith.constant 0 : index
    %3 = vector.load %arg3[%c0_3, %c0_4] : memref<1x128xf32, #tpu.memory_space<vmem>>, vector<1x128xf32>
    %4 = vector.broadcast %3 : vector<1x128xf32> to vector<32x128xf32>
    %5 = arith.addf %2, %4 : vector<32x128xf32>
    %c0_5 = arith.constant 0 : index
    %c0_6 = arith.constant 0 : index
    %6 = vector.load %arg4[%c0_5, %c0_6] : memref<32x128xf32, #tpu.memory_space<vmem>>, vector<32x128xf32>
    tpu.vector_store %arg4[%c0_5, %c0_6], %5 {strides = array<i32>} : memref<32x128xf32, #tpu.memory_space<vmem>>, vector<32x128xf32>,
    return
  }
  func.func @transform_0(%arg0: i32) -> (i32, i32) {
    %c0_i32 = arith.constant 0 : i32
    %c0_i32_0 = arith.constant 0 : i32
    return %arg0, %c0_i32 : i32, i32
  }
  func.func @transform_1(%arg0: i32) -> (i32, i32) {
    %c0_i32 = arith.constant 0 : i32
    %c0_i32_0 = arith.constant 0 : i32
    %c0_i32_1 = arith.constant 0 : i32
    return %c0_i32, %c0_i32_0 : i32, i32
  }
  func.func @transform_2(%arg0: i32) -> (i32, i32) {
    %c0_i32 = arith.constant 0 : i32
    %c0_i32_0 = arith.constant 0 : i32
    %c0_i32_1 = arith.constant 0 : i32
    return %c0_i32, %c0_i32_0 : i32, i32
  }
  func.func @transform_3(%arg0: i32) -> (i32, i32) {
    %c0_i32 = arith.constant 0 : i32
    %c0_i32_0 = arith.constant 0 : i32
    return %arg0, %c0_i32 : i32, i32
  }
}

</mosaic_0001>

<llo_original>
// kernel: img_patches_forward.1
$region0: #{img_patches_forward.1}
  #allocation0 [shape = 'u32[]', space=smem, size = 0x4, offset = 0x4, fixed_abs, tag = 'smem constant byte address 0x4 - core index']
  #allocation1 [shape = 'u32[144,128]{1,0:T(1,128)}', space=vmem, size = 0x12000, scoped, tag = 'internal scratch']
  %s0 = inlined_call_operand.vmem [shape: f32[32,64], index: 0, kind: input, shape index: {}]
  %s1 = inlined_call_operand.vmem [shape: f32[64,128], index: 1, kind: input, shape index: {}]
  %s2 = inlined_call_operand.vmem [shape: f32[1,128], index: 2, kind: input, shape index: {}]
  %s3 = inlined_call_operand.hbm [shape: f32[32,128], index: 3, kind: output, shape index: {}]
  %s4 = sld [smem:[#allocation0]]
  $region22: #{img_patches_forward.1} parent=0
    _
  %s6 = ssub.s32 1, %s4
  %s7 = scalar_select 0, %s6, %s4
  $region1: #{img_patches_forward.1} parent=0
    #allocation2 [shape = 'u8[16384]{0}', space=vmem, size = 0x4000, scoped, tag = 'output window, operand 0, single buffered']
    #allocation3 [shape = 's32[1]{0}', space=sflag, size = 0x4, scoped, tag = 'scoped memory for img_patches_forward.1']
    %8 = vsyncpa [#allocation3], 0
    // Predicated region
    $region2: #{img_patches_forward.1} parent=1 // pred_check
      _
    $region3: #{img_patches_forward.1} parent=1 // pred_check_branch
      %10 = sbr.rel (0) target = $region5
    $region4: #{img_patches_forward.1} parent=1 // pred_region
      _
    $region5: #{img_patches_forward.1} parent=1 // pred_fallthru
      _
    // Predicated region
    $region6: #{img_patches_forward.1} parent=1 // pred_check
      _
    $region7: #{img_patches_forward.1} parent=1 // pred_check_branch
      %12 = sbr.rel (0) target = $region9
    $region8: #{img_patches_forward.1} parent=1 // pred_region
      _
    $region9: #{img_patches_forward.1} parent=1 // pred_fallthru
      _
    // Predicated region
    $region10: #{img_patches_forward.1} parent=1 // pred_check
      _
    $region11: #{img_patches_forward.1} parent=1 // pred_check_branch
      %14 = sbr.rel (0) target = $region13
    $region12: #{img_patches_forward.1} parent=1 // pred_region
      _
    $region13: #{img_patches_forward.1} parent=1 // pred_fallthru
      _
    %v15 = vld [vmem:[%s0] sm:$0xff]
    %v16 = vld [vmem:[%s0 + $0x8] sm:$0xff]
    %v17 = vld [vmem:[%s0 + $0x10] sm:$0xff]
    %v18 = vld [vmem:[%s0 + $0x18] sm:$0xff]
    %v19 = vld [vmem:[%s1] sm:$0xff]
    %v20 = vld [vmem:[%s1 + $0x8] sm:$0xff]
    %v21 = vld [vmem:[%s1 + $0x10] sm:$0xff]
    %v22 = vld [vmem:[%s1 + $0x18] sm:$0xff]
    %v23 = vld [vmem:[%s1 + $0x20] sm:$0xff]
    %v24 = vld [vmem:[%s1 + $0x28] sm:$0xff]
    %v25 = vld [vmem:[%s1 + $0x30] sm:$0xff]
    %v26 = vld [vmem:[%s1 + $0x38] sm:$0xff]
    %v27 = vld [vmem:[%s2] sm:$0x1]
    %v29 = vlaneseq
    %v30 = vshrl.u32 %v29, 7
    %v31 = vsub.s32 0, %v30
    %v32 = vrot.slane %v27, %v31
    %vm34 = vcmask 523264
    %v36 = vsel %vm34, %v15, 0
    %v39 = vsel %vm34, %v16, 0
    %v42 = vsel %vm34, %v17, 0
    %v45 = vsel %vm34, %v18, 0
    %47 = vmatprep.subr.mxu0 0.0
    %48 = vmatpush1.msra.mxu0 %v19
    %49 = vmatprep.subr.mxu0 0.0
    %50 = vmatpush1.msra.mxu0 %v20
    %51 = vmatprep.subr.mxu0 0.0
    %52 = vmatpush1.msra.mxu0 %v21
    %53 = vmatprep.subr.mxu0 0.0
    %54 = vmatpush1.msra.mxu0 %v22
    %55 = vmatprep.subr.mxu0 0.0
    %56 = vmatpush1.msra.mxu0 %v23
    %57 = vmatprep.subr.mxu0 0.0
    %58 = vmatpush1.msra.mxu0 %v24
    %59 = vmatprep.subr.mxu0 0.0
    %60 = vmatpush1.msra.mxu0 %v25
    %61 = vmatprep.subr.mxu0 0.0
    %62 = vmatpush1.msra.mxu0 %v26
    %63 = vmatprep.subr.mxu0 0.0
    %64 = vmatpush1.msra.mxu0 0.0
    %65 = vmatprep.subr.mxu0 0.0
    %66 = vmatpush1.msra.mxu0 0.0
    %67 = vmatprep.subr.mxu0 0.0
    %68 = vmatpush1.msra.mxu0 0.0
    %69 = vmatprep.subr.mxu0 0.0
    %70 = vmatpush1.msra.mxu0 0.0
    %71 = vmatprep.subr.mxu0 0.0
    %72 = vmatpush1.msra.mxu0 0.0
    %73 = vmatprep.subr.mxu0 0.0
    %74 = vmatpush1.msra.mxu0 0.0
    %75 = vmatprep.subr.mxu0 0.0
    %76 = vmatpush1.msra.mxu0 0.0
    %77 = vmatprep.subr.mxu0 0.0
    %78 = vmatpush1.msra.mxu0 0.0
    %79 = vmatprep.subr.mxu0 0.0
    %80 = vmatpush1.msra.mxu0 0.0
    %81 = vmatprep.subr.mxu0 0.0
    %82 = vmatpush1.msra.mxu0 0.0
    %83 = vmatprep.subr.mxu0 0.0
    %84 = vmatpush1.msra.mxu0 0.0
    %85 = vmatprep.subr.mxu0 0.0
    %86 = vmatpush1.msra.mxu0 0.0
    %87 = vmatprep.subr.mxu0 0.0
    %88 = vmatpush1.msra.mxu0 0.0
    %89 = vmatprep.subr.mxu0 0.0
    %90 = vmatpush1.msra.mxu0 0.0
    %91 = vmatprep.subr.mxu0 0.0
    %92 = vmatpush1.msra.mxu0 0.0
    %93 = vmatprep.subr.mxu0 0.0
    %94 = vmatpush1.msra.mxu0 0.0
    %95 = vmatprep.subr.mxu0 0.0
    %96 = vmatpush1.msra.mxu0 0.0
    %97 = vmatprep.subr.mxu0 0.0
    %98 = vmatpush1.msra.mxu0 0.0
    %99 = vmatprep.subr.mxu0 0.0
    %100 = vmatpush1.msra.mxu0 0.0
    %101 = vmatprep.subr.mxu0 0.0
    %102 = vmatpush1.msra.mxu0 0.0
    %103 = vmatprep.subr.mxu0 0.0
    %104 = vmatpush1.msra.mxu0 0.0
    %105 = vmatprep.subr.mxu0 0.0
    %106 = vmatpush1.msra.mxu0 0.0
    %107 = vmatprep.subr.mxu0 0.0
    %108 = vmatpush1.msra.mxu0 0.0
    %109 = vmatprep.subr.mxu0 0.0
    %110 = vmatpush1.msra.mxu0 0.0
    %111 = vmatprep.mubr.f32.mxu0 0.0
    %112 = vmatmul.mubr.f32.gmra.mrb[0].mxu0 %v36
    %v113 = vpop.f32.mrb[0].mxu0
    %v114 = vadd.f32 %v32, %v113
    %v115 = vpop.f32.mrb[0].mxu0
    %116 = vmatprep.mubr.f32.mxu0 0.0
    %117 = vmatmul.mubr.f32.gmra.mrb[0].mxu0 %v39
    %v118 = vpop.f32.mrb[0].mxu0
    %v119 = vadd.f32 %v32, %v118
    %v120 = vpop.f32.mrb[0].mxu0
    %121 = vmatprep.mubr.f32.mxu0 0.0
    %122 = vmatmul.mubr.f32.gmra.mrb[0].mxu0 %v42
    %v123 = vpop.f32.mrb[0].mxu0
    %v124 = vadd.f32 %v32, %v123
    %v125 = vpop.f32.mrb[0].mxu0
    %126 = vmatprep.mubr.f32.mxu0 0.0
    %127 = vmatmul.mubr.f32.gmra.mrb[0].mxu0 %v45
    %v128 = vpop.f32.mrb[0].mxu0
    %v129 = vadd.f32 %v32, %v128
    %v130 = vpop.f32.mrb[0].mxu0
    %131 = vdwg.mxu0
    %132 = vst [vmem:[#allocation2] sm:$0xff] %v114
    %133 = vst [vmem:[#allocation2 + $0x8] sm:$0xff] %v119
    %134 = vst [vmem:[#allocation2 + $0x10] sm:$0xff] %v124
    %135 = vst [vmem:[#allocation2 + $0x18] sm:$0xff] %v129
    // Predicated region
    $region14: #{img_patches_forward.1} parent=1 // pred_check
      _
    $region15: #{img_patches_forward.1} parent=1 // pred_check_branch
      %137 = sbr.rel (0) target = $region17
    $region16: #{img_patches_forward.1} parent=1 // pred_region
      %s139 = ssub.s32 512, 512
      %140 = vsyncadd [#allocation3], %s139
      %s141 = sshll.u32 [#allocation2], 4
      %s142 = int_to_ptr.vmem [resolvable:$true] %s141
      %147 = dma.vmem_to_hbm [thread:$0]  %s142, 512, %s3, [#allocation3], 128, 128, 8
    $region17: #{img_patches_forward.1} parent=1 // pred_fallthru
      _
    // Predicated region
    $region18: #{img_patches_forward.1} parent=1 // pred_check
      _
    $region19: #{img_patches_forward.1} parent=1 // pred_check_branch
      %149 = sbr.rel (0) target = $region21
    $region20: #{img_patches_forward.1} parent=1 // pred_region
      %150 = dma.done [#allocation3], 512
    $region21: #{img_patches_forward.1} parent=1 // pred_fallthru
      _
    %151 = vsyncpa [#allocation3], 1

</llo_original>
